<compile_context>
chip_gen: v5e
topology: v5e:2x2
jax: 0.10.0
libtpu: 0.0.40
codegen_flags: <defaults>
</compile_context>

<pallas_src>
import functools
import math

import jax
import jax.numpy as jnp
from jax.experimental import pallas as pl
from jax.experimental.pallas import tpu as pltpu


def _curricular_tile_kernel(label_ref, side_ref, emb_ref, t_ref, w_ref,
                            out_ref, *, s):
    """Computes one (B, TILE_C) tile of the scaled CurricularFace logits."""
    j = pl.program_id(0)

    emb = emb_ref[...]                                   # (B, E)       bf16
    w = w_ref[...]                                       # (E, TILE_C)  bf16

    # Column sum-of-squares of the raw bf16 weight tile: square in bf16 (cheap
    # on bf16-native VALUs) and reduce over E on the MXU (ones(8,E) @ w*w),
    # instead of a f32 cast + square + cross-sublane reduce on the VALU/XLU.
    w_sq = w * w                                         # (E, TILE_C)  bf16
    ones = jnp.ones((8, w.shape[0]), dtype=jnp.bfloat16)
    col_ss = jnp.dot(ones, w_sq,
                     preferred_element_type=jnp.float32)[0:1, :]   # (1, TILE_C)
    col_inv = jax.lax.rsqrt(jnp.maximum(col_ss, 1e-30))

    row_inv = side_ref[:, 0:1]                           # (B, 1) 1/||emb||
    ctm = side_ref[:, 1:2]                               # (B, 1) cos(theta+m)
    ftl = side_ref[:, 2:3]                               # (B, 1) final target logit
    t_new = t_ref[0]                                     # scalar (SMEM)

    # bf16 MXU matmul with f32 accumulation; fold both norms into the result.
    cos = jnp.dot(emb, w, preferred_element_type=jnp.float32)      # (B, TILE_C)
    cos = jnp.clip(cos * row_inv * col_inv, -1.0, 1.0)

    B, TC = cos.shape
    col = jax.lax.broadcasted_iota(jnp.int32, (B, TC), 1)
    onehot = col == (label_ref[...] - j * TC)            # (B, TC) bool

    # Fused epilogue: one where-chain over the tile, single final scale by s.
    hard = cos * (t_new + cos)
    out = jnp.where(onehot, ftl, jnp.where(cos > ctm, hard, cos))
    out_ref[...] = (out * s).astype(out_ref.dtype)


def curricular_face(embeddings, label, weight, t, *, m=0.5, s=64.0,
                    tile_c=None, out_dtype=jnp.float32):
    """Returns (scaled_logits (B, C) out_dtype, updated_t (1,) f32)."""
    B, E = embeddings.shape
    E2, C = weight.shape
    assert E == E2

    cos_m, sin_m = math.cos(m), math.sin(m)
    threshold = math.cos(math.pi - m)
    mm = math.sin(math.pi - m) * m

    # bf16 operands for the MXU; all norms / scalars stay f32.
    emb_bf = embeddings.astype(jnp.bfloat16)
    w_bf = weight.astype(jnp.bfloat16)

    emb_f = emb_bf.astype(jnp.float32)
    row_inv = jax.lax.rsqrt(
        jnp.maximum(jnp.sum(emb_f * emb_f, axis=1, keepdims=True), 1e-30))

    # Tiny prologue (B*E work): gather the label columns of the weight and
    # compute target_logit / cos_theta_m / final_target / the t update once,
    # so every class tile in the Pallas grid is independent.
    w_lab = jnp.take(w_bf, label, axis=1).astype(jnp.float32).T      # (B, E)
    col_inv_lab = jax.lax.rsqrt(
        jnp.maximum(jnp.sum(w_lab * w_lab, axis=1, keepdims=True), 1e-30))
    target_logit = jnp.clip(
        jnp.sum(emb_f * w_lab, axis=1, keepdims=True) * row_inv * col_inv_lab,
        -1.0, 1.0)                                                   # (B, 1)
    sin_theta = jnp.sqrt(jnp.maximum(1.0 - target_logit * target_logit, 0.0))
    cos_theta_m = target_logit * cos_m - sin_theta * sin_m
    final_target = jnp.where(target_logit > threshold,
                             cos_theta_m, target_logit - mm)
    t_new = (jnp.mean(target_logit) * 0.01
             + 0.99 * t.reshape(-1)[0]).astype(jnp.float32)

    # ---- class-tile selection -------------------------------------------------
    if tile_c is None:
        blocks = pl.cdiv(C, 128)
        # Aim for >= 8 class tiles (keeps v7x's two TCs + the weight
        # double-buffer busy), cap the tile at 2048 lanes.
        tile_c = 128 * max(1, min(16, blocks // 8))
        # Keep the per-step working set well inside v7x's 64 MiB VMEM.
        while tile_c > 128 and (2 * E * tile_c * 2 + 10 * B * tile_c * 4) > (24 << 20):
            tile_c //= 2
    else:
        tile_c = 128 * max(1, pl.cdiv(int(tile_c), 128))   # lane-tiling constraint

    # Pad C up to a multiple of tile_c (never fall back to a single giant tile).
    C_pad = tile_c * pl.cdiv(C, tile_c)
    if C_pad != C:
        w_bf = jnp.pad(w_bf, ((0, 0), (0, C_pad - C)))
    grid = (C_pad // tile_c,)

    labels_2d = label.reshape(B, 1).astype(jnp.int32)
    side = jnp.concatenate([row_inv, cos_theta_m, final_target], axis=1)  # (B, 3)

    out_itemsize = jnp.dtype(out_dtype).itemsize
    vmem_bytes = (2 * E * tile_c * 2            # double-buffered bf16 weight tile
                  + 2 * B * tile_c * out_itemsize   # double-buffered output tile
                  + 2 * B * E * 2               # resident bf16 embeddings
                  + E * tile_c * 2              # w*w bf16 temp
                  + 8 * tile_c * 4              # MXU-reduce result
                  + 6 * B * tile_c * 4)         # f32 epilogue temps
    vmem_limit = int(min(64 << 20, max(32 << 20, 2 * vmem_bytes)))

    kernel = functools.partial(_curricular_tile_kernel, s=s)

    out = pl.pallas_call(
        kernel,
        out_shape=jax.ShapeDtypeStruct((B, C_pad), out_dtype),
        grid=grid,
        in_specs=[
            pl.BlockSpec((B, 1), lambda j: (0, 0)),        # labels
            pl.BlockSpec((B, 3), lambda j: (0, 0)),        # row_inv | ctm | ftl
            pl.BlockSpec((B, E), lambda j: (0, 0)),        # embeddings (bf16)
            pl.BlockSpec(memory_space=pltpu.MemorySpace.SMEM),  # updated t scalar
            pl.BlockSpec((E, tile_c), lambda j: (0, j)),   # streamed weight tile
        ],
        out_specs=pl.BlockSpec((B, tile_c), lambda j: (0, j)),
        compiler_params=pltpu.CompilerParams(
            dimension_semantics=("parallel",),
            vmem_limit_bytes=vmem_limit),
    )(labels_2d, side, emb_bf, t_new.reshape(1), w_bf)

    if C_pad != C:
        out = out[:, :C]
    return out, t_new.reshape(1)


def _reference(embeddings, label, weight, t, *, m=0.5, s=64.0):
    """Pure-JAX reference mirroring the PyTorch forward (f32 math)."""
    cos_m, sin_m = math.cos(m), math.sin(m)
    threshold = math.cos(math.pi - m)
    mm = math.sin(math.pi - m) * m
    emb_n = embeddings / jnp.linalg.norm(embeddings, axis=1, keepdims=True)
    w_n = weight / jnp.linalg.norm(weight, axis=0, keepdims=True)
    cos = jnp.clip(emb_n @ w_n, -1.0, 1.0)
    B, C = cos.shape
    tgt = cos[jnp.arange(B), label][:, None]
    sin_theta = jnp.sqrt(1.0 - tgt ** 2)
    cos_theta_m = tgt * cos_m - sin_theta * sin_m
    mask = cos > cos_theta_m
    final_tgt = jnp.where(tgt > threshold, cos_theta_m, tgt - mm)
    t_new = jnp.mean(tgt) * 0.01 + 0.99 * t[0]
    cos = jnp.where(mask, cos * (t_new + cos), cos)
    onehot = jax.nn.one_hot(label, C, dtype=bool)
    cos = jnp.where(onehot, jnp.broadcast_to(final_tgt, (B, C)), cos)
    return cos * s, t_new.reshape(1)


if __name__ == "__main__":
    B, E, C = 8, 256, 1024   # batch, emb_size (module default 256), num_classes
    key = jax.random.PRNGKey(0)
    k1, k2, k3 = jax.random.split(key, 3)

    embeddings = jax.random.normal(k1, (B, E), dtype=jnp.float32)
    # nn.init.normal_(self.kernel, std=0.01)
    weight = 0.01 * jax.random.normal(k2, (E, C), dtype=jnp.float32)
    label = jax.random.randint(k3, (B,), 0, C, dtype=jnp.int32)
    t = jnp.zeros((1,), dtype=jnp.float32)   # register_buffer('t', zeros(1))

    # The kernel computes with bf16 MXU operands (by design); validate against
    # the exact f32 reference evaluated on the same bf16-rounded inputs.
    emb_q = embeddings.astype(jnp.bfloat16).astype(jnp.float32)
    w_q = weight.astype(jnp.bfloat16).astype(jnp.float32)

    # tile_c=256 -> grid of 4 class tiles to exercise the streamed pipeline.
    out, t_new = curricular_face(embeddings, label, weight, t, tile_c=256)
    jax.block_until_ready((out, t_new))
    ref_out, ref_t = _reference(emb_q, label, w_q, t)
    assert jnp.allclose(out, ref_out, atol=1e-2, rtol=1e-2), "logits mismatch"
    assert jnp.allclose(t_new, ref_t, atol=1e-5), "t buffer mismatch"

    # Non-divisible class count exercises the C-padding path + default tile_c.
    C2 = 1000
    weight2 = 0.01 * jax.random.normal(k2, (E, C2), dtype=jnp.float32)
    label2 = jax.random.randint(k3, (B,), 0, C2, dtype=jnp.int32)
    out2, t2 = curricular_face(embeddings, label2, weight2, t)
    jax.block_until_ready((out2, t2))
    ref2, ref_t2 = _reference(emb_q, label2,
                              weight2.astype(jnp.bfloat16).astype(jnp.float32), t)
    assert jnp.allclose(out2, ref2, atol=1e-2, rtol=1e-2), "padded-C logits mismatch"
    assert jnp.allclose(t2, ref_t2, atol=1e-5), "padded-C t mismatch"

    print("KERNEL_OK")
</pallas_src>

<mosaic_0001>
module attributes {stable_mosaic.version = 11 : i64} {
  func.func @_curricular_tile_kernel(%arg0: i32, %arg1: memref<8x1xi32, #tpu.memory_space<vmem>>, %arg2: memref<8x3xf32, #tpu.memory_space<vmem>>, %arg3: memref<8x256xbf16, #tpu.memory_space<vmem>>, %arg4: memref<1xf32, #tpu.memory_space<smem>>, %arg5: memref<256x256xbf16, #tpu.memory_space<vmem>>, %arg6: memref<8x256xf32, #tpu.memory_space<vmem>>) attributes {dimension_semantics = [#tpu.dimension_semantics<parallel>], iteration_bounds = array<i64: 4>, scalar_prefetch = 0 : i64, scratch_operands = 0 : i64, tpu.core_type = #tpu.core_type<tc>, window_params = [{pipeline_mode = #tpu.pipeline_mode<synchronous>, transform_indices = @transform_0, window_bounds = array<i64: 8, 1>}, {pipeline_mode = #tpu.pipeline_mode<synchronous>, transform_indices = @transform_1, window_bounds = array<i64: 8, 3>}, {pipeline_mode = #tpu.pipeline_mode<synchronous>, transform_indices = @transform_2, window_bounds = array<i64: 8, 256>}, {transform_indices = @transform_3, window_bounds = array<i64: 1>}, {transform_indices = @transform_4, window_bounds = array<i64: 256, 256>}, {transform_indices = @transform_5, window_bounds = array<i64: 8, 256>}]} {
    %c0 = arith.constant 0 : index
    %c0_0 = arith.constant 0 : index
    %0 = vector.load %arg3[%c0, %c0_0] : memref<8x256xbf16, #tpu.memory_space<vmem>>, vector<8x256xbf16>
    %c0_1 = arith.constant 0 : index
    %c0_2 = arith.constant 0 : index
    %1 = vector.load %arg5[%c0_1, %c0_2] : memref<256x256xbf16, #tpu.memory_space<vmem>>, vector<256x256xbf16>
    %2 = arith.mulf %1, %1 : vector<256x256xbf16>
    %cst = arith.constant 1.000000e+00 : bf16
    %3 = vector.broadcast %cst : bf16 to vector<8x256xbf16>
    %cst_3 = arith.constant dense<0.000000e+00> : vector<8x256xf32>
    %4 = tpu.matmul %3, %2, %cst_3 {dimension_numbers = #tpu.dot_dimension_numbers<[1], [0], [0], [1], [0, 0, 1, 1], [], []>} : vector<8x256xbf16>, vector<256x256xbf16>, vector<8x256xf32> -> vector<8x256xf32>
    %5 = vector.extract_strided_slice %4 {offsets = [0, 0], sizes = [1, 256], strides = [1, 1]} : vector<8x256xf32> to vector<1x256xf32>
    %cst_4 = arith.constant 1.000000e-30 : f32
    %6 = vector.broadcast %cst_4 : f32 to vector<1x256xf32>
    %7 = arith.maximumf %5, %6 : vector<1x256xf32>
    %8 = math.rsqrt %7 : vector<1x256xf32>
    %c0_5 = arith.constant 0 : index
    %c0_6 = arith.constant 0 : index
    %9 = vector.load %arg2[%c0_5, %c0_6] : memref<8x3xf32, #tpu.memory_space<vmem>>, vector<8x1xf32>
    %c0_7 = arith.constant 0 : index
    %c1 = arith.constant 1 : index
    %10 = vector.load %arg2[%c0_7, %c1] : memref<8x3xf32, #tpu.memory_space<vmem>>, vector<8x1xf32>
    %c0_8 = arith.constant 0 : index
    %c2 = arith.constant 2 : index
    %11 = vector.load %arg2[%c0_8, %c2] : memref<8x3xf32, #tpu.memory_space<vmem>>, vector<8x1xf32>
    %c0_9 = arith.constant 0 : index
    %12 = memref.load %arg4[%c0_9] : memref<1xf32, #tpu.memory_space<smem>>
    %cst_10 = arith.constant dense<0.000000e+00> : vector<8x256xf32>
    %13 = tpu.matmul %0, %1, %cst_10 {dimension_numbers = #tpu.dot_dimension_numbers<[1], [0], [0], [1], [0, 0, 1, 1], [], []>} : vector<8x256xbf16>, vector<256x256xbf16>, vector<8x256xf32> -> vector<8x256xf32>
    %14 = vector.broadcast %9 : vector<8x1xf32> to vector<8x256xf32>
    %15 = arith.mulf %13, %14 : vector<8x256xf32>
    %16 = vector.broadcast %8 : vector<1x256xf32> to vector<8x256xf32>
    %17 = arith.mulf %15, %16 : vector<8x256xf32>
    %cst_11 = arith.constant -1.000000e+00 : f32
    %cst_12 = arith.constant 1.000000e+00 : f32
    %18 = vector.broadcast %cst_11 : f32 to vector<8x256xf32>
    %19 = arith.maximumf %18, %17 : vector<8x256xf32>
    %20 = vector.broadcast %cst_12 : f32 to vector<8x256xf32>
    %21 = arith.minimumf %20, %19 : vector<8x256xf32>
    %22 = tpu.iota {dimensions = array<i32: 1>} : vector<8x256xi32>
    %c0_13 = arith.constant 0 : index
    %c0_14 = arith.constant 0 : index
    %23 = vector.load %arg1[%c0_13, %c0_14] : memref<8x1xi32, #tpu.memory_space<vmem>>, vector<8x1xi32>
    %c256_i32 = arith.constant 256 : i32
    %24 = arith.muli %arg0, %c256_i32 : i32
    %25 = vector.broadcast %24 : i32 to vector<8x1xi32>
    %26 = arith.subi %23, %25 : vector<8x1xi32>
    %27 = vector.broadcast %26 : vector<8x1xi32> to vector<8x256xi32>
    %28 = arith.cmpi eq, %22, %27 : vector<8x256xi32>
    %29 = vector.broadcast %12 : f32 to vector<8x256xf32>
    %30 = arith.addf %29, %21 : vector<8x256xf32>
    %31 = arith.mulf %21, %30 : vector<8x256xf32>
    %32 = vector.broadcast %10 : vector<8x1xf32> to vector<8x256xf32>
    %33 = arith.cmpf ogt, %21, %32 : vector<8x256xf32>
    %34 = arith.select %33, %31, %21 : vector<8x256xi1>, vector<8x256xf32>
    %35 = vector.shape_cast %11 : vector<8x1xf32> to vector<8x1xf32>
    %36 = vector.broadcast %35 : vector<8x1xf32> to vector<8x256xf32>
    %37 = arith.select %28, %36, %34 : vector<8x256xi1>, vector<8x256xf32>
    %cst_15 = arith.constant 6.400000e+01 : f32
    %38 = vector.broadcast %cst_15 : f32 to vector<8x256xf32>
    %39 = arith.mulf %37, %38 : vector<8x256xf32>
    %c0_16 = arith.constant 0 : index
    %c0_17 = arith.constant 0 : index
    %40 = vector.load %arg6[%c0_16, %c0_17] : memref<8x256xf32, #tpu.memory_space<vmem>>, vector<8x256xf32>
    tpu.vector_store %arg6[%c0_16, %c0_17], %39 {strides = array<i32>} : memref<8x256xf32, #tpu.memory_space<vmem>>, vector<8x256xf32>,
    return
  }
  func.func @transform_0(%arg0: i32) -> (i32, i32) {
    %c0_i32 = arith.constant 0 : i32
    %c0_i32_0 = arith.constant 0 : i32
    %c0_i32_1 = arith.constant 0 : i32
    return %c0_i32, %c0_i32_0 : i32, i32
  }
  func.func @transform_1(%arg0: i32) -> (i32, i32) {
    %c0_i32 = arith.constant 0 : i32
    %c0_i32_0 = arith.constant 0 : i32
    %c0_i32_1 = arith.constant 0 : i32
    return %c0_i32, %c0_i32_0 : i32, i32
  }
  func.func @transform_2(%arg0: i32) -> (i32, i32) {
    %c0_i32 = arith.constant 0 : i32
    %c0_i32_0 = arith.constant 0 : i32
    %c0_i32_1 = arith.constant 0 : i32
    return %c0_i32, %c0_i32_0 : i32, i32
  }
  func.func @transform_3(%arg0: i32) -> i32 {
    %c0_i32 = arith.constant 0 : i32
    %c0_i32_0 = arith.constant 0 : i32
    return %c0_i32 : i32
  }
  func.func @transform_4(%arg0: i32) -> (i32, i32) {
    %c0_i32 = arith.constant 0 : i32
    %c0_i32_0 = arith.constant 0 : i32
    return %c0_i32, %arg0 : i32, i32
  }
  func.func @transform_5(%arg0: i32) -> (i32, i32) {
    %c0_i32 = arith.constant 0 : i32
    %c0_i32_0 = arith.constant 0 : i32
    return %c0_i32, %arg0 : i32, i32
  }
}

</mosaic_0001>

<llo_original>
// kernel: tpu_custom_call.1
$region0: #{tpu_custom_call.1}
  #allocation0 [shape = 'u32[]', space=smem, size = 0x4, offset = 0x4, fixed_abs, tag = 'smem constant byte address 0x4 - core index']
  #allocation1 [shape = 'u32[72,128]{1,0:T(1,128)}', space=vmem, size = 0x9000, scoped, tag = 'internal scratch']
  #allocation2 [shape = 'f32[1]{0:T(128)S(6)}', space=smem, size = 0x200, scoped, tag = 'scoped memory for tpu_custom_call.1']
  %s0 = inlined_call_operand.vmem [shape: s32[8,1], index: 0, kind: input, shape index: {}]
  %s1 = inlined_call_operand.vmem [shape: f32[8,3], index: 1, kind: input, shape index: {}]
  %s2 = inlined_call_operand.vmem [shape: bf16[8,256], index: 2, kind: input, shape index: {}]
  %s3 = inlined_call_operand.<no memory space> [shape: f32[1], index: 3, kind: input, shape index: {}]
  %s4 = inlined_call_operand.hbm [shape: bf16[256,1024], index: 4, kind: input, shape index: {}]
  %s5 = inlined_call_operand.hbm [shape: f32[8,1024], index: 5, kind: output, shape index: {}]
  %s6 = sld [smem:[#allocation0]]
  $region57: #{tpu_custom_call.1} parent=0
    _
  %s8 = ssub.s32 1, %s6
  %s9 = scalar_select 0, %s8, %s6
  %10 = sst [smem:[#allocation2]] %s3
  $region1: #{tpu_custom_call.1} parent=0
    #allocation3 [shape = 'u8[262144]{0}', space=vmem, size = 0x40000, scoped, tag = 'input window, operand 4']
    #allocation4 [shape = 's32[2]{0}', space=sflag, size = 0x8, scoped, tag = 'scoped memory for tpu_custom_call.1']
    #allocation5 [shape = 's32[2]{0}', space=sflag, size = 0x8, scoped, tag = 'scoped memory for tpu_custom_call.1']
    #allocation6 [shape = 'u8[16384]{0}', space=vmem, size = 0x4000, scoped, tag = 'output window, operand 0']
    %11 = vsyncpa [#allocation4], 0
    %s12 = scalar_lea.sflag [#allocation4], 1
    %13 = vsyncpa %s12, 0
    %14 = vsyncpa [#allocation5], 0
    %s15 = scalar_lea.sflag [#allocation5], 1
    %16 = vsyncpa %s15, 0
    loop: start=0, step=1, limit=6
    $region2: #{tpu_custom_call.1} parent=1 // loop_pre_header
      _
    $region3: #{tpu_custom_call.1} parent=1 // loop_header
      %s18 = sphi 0, %s22
      %p19 = scmp.ge.s32.totalorder %s18, 6
      %s26 = sphi 0, %s26
      %s28 = sphi 0, %s26
      %s29 = sphi 0, %s28
      %s43 = sphi 0, %s29
      %s47 = sphi 0, %s47
      %s49 = sphi 0, %s47
      %s50 = sphi 0, %s49
      %s64 = sphi 0, %s50
      %s68 = sphi 0, %s68
      %s70 = sphi 0, %s68
      %s71 = sphi 0, %s70
      %s85 = sphi 0, %s71
      %s89 = sphi 0, %s89
      %s91 = sphi 0, %s89
      %s92 = sphi 0, %s91
      %s106 = sphi 0, %s92
      %s112 = sphi 0, %s114
      %s115 = sphi 0, %s112
      %s116 = sphi 0, %s115
      %s132 = sphi 0, %s116
      %s138 = sphi 0, %s140
      %s141 = sphi 0, %s138
      %s142 = sphi 0, %s141
      %s158 = sphi 0, %s142
    $region4: #{tpu_custom_call.1} parent=1 // loop_header_branch
      %21 = sbr.rel (%p19) target = $region8
    $region5: #{tpu_custom_call.1} parent=1 // loop_body
      %s23 = ssub.s32 %s18, 1
      %s24 = ssub.s32 %s18, 2
      %s25 = sadd.s32 %s18, 1
      %s27 = sadd.s32 %s26, 1
      %p30 = scmp.eq.s32.totalorder %s18, 3
      %p31 = scmp.ne.s32.totalorder %s26, %s28
      %p32 = scmp.eq.s32.totalorder %s18, 0
      %p33 = por %p31, %p32
      %p34 = scmp.ne.s32.totalorder %s26, %s28
      %p35 = scmp.eq.s32.totalorder %s23, 3
      %p36 = por %p34, %p35
      %p37 = scmp.ne.s32.totalorder %s28, %s29
      %p38 = scmp.eq.s32.totalorder %s23, 0
      %p39 = por %p37, %p38
      %p40 = scmp.ne.s32.totalorder %s28, %s29
      %p41 = scmp.eq.s32.totalorder %s24, 3
      %p42 = por %p40, %p41
      %p44 = scmp.ne.s32.totalorder %s29, %s43
      %p45 = scmp.eq.s32.totalorder %s24, 0
      %p46 = por %p44, %p45
      %s48 = sadd.s32 %s47, 1
      %p51 = scmp.eq.s32.totalorder %s18, 3
      %p52 = scmp.ne.s32.totalorder %s47, %s49
      %p53 = scmp.eq.s32.totalorder %s18, 0
      %p54 = por %p52, %p53
      %p55 = scmp.ne.s32.totalorder %s47, %s49
      %p56 = scmp.eq.s32.totalorder %s23, 3
      %p57 = por %p55, %p56
      %p58 = scmp.ne.s32.totalorder %s49, %s50
      %p59 = scmp.eq.s32.totalorder %s23, 0
      %p60 = por %p58, %p59
      %p61 = scmp.ne.s32.totalorder %s49, %s50
      %p62 = scmp.eq.s32.totalorder %s24, 3
      %p63 = por %p61, %p62
      %p65 = scmp.ne.s32.totalorder %s50, %s64
      %p66 = scmp.eq.s32.totalorder %s24, 0
      %p67 = por %p65, %p66
      %s69 = sadd.s32 %s68, 1
      %p72 = scmp.eq.s32.totalorder %s18, 3
      %p73 = scmp.ne.s32.totalorder %s68, %s70
      %p74 = scmp.eq.s32.totalorder %s18, 0
      %p75 = por %p73, %p74
      %p76 = scmp.ne.s32.totalorder %s68, %s70
      %p77 = scmp.eq.s32.totalorder %s23, 3
      %p78 = por %p76, %p77
      %p79 = scmp.ne.s32.totalorder %s70, %s71
      %p80 = scmp.eq.s32.totalorder %s23, 0
      %p81 = por %p79, %p80
      %p82 = scmp.ne.s32.totalorder %s70, %s71
      %p83 = scmp.eq.s32.totalorder %s24, 3
      %p84 = por %p82, %p83
      %p86 = scmp.ne.s32.totalorder %s71, %s85
      %p87 = scmp.eq.s32.totalorder %s24, 0
      %p88 = por %p86, %p87
      %s90 = sadd.s32 %s89, 1
      %p93 = scmp.eq.s32.totalorder %s18, 3
      %p94 = scmp.ne.s32.totalorder %s89, %s91
      %p95 = scmp.eq.s32.totalorder %s18, 0
      %p96 = por %p94, %p95
      %p97 = scmp.ne.s32.totalorder %s89, %s91
      %p98 = scmp.eq.s32.totalorder %s23, 3
      %p99 = por %p97, %p98
      %p100 = scmp.ne.s32.totalorder %s91, %s92
      %p101 = scmp.eq.s32.totalorder %s23, 0
      %p102 = por %p100, %p101
      %p103 = scmp.ne.s32.totalorder %s91, %s92
      %p104 = scmp.eq.s32.totalorder %s24, 3
      %p105 = por %p103, %p104
      %p107 = scmp.ne.s32.totalorder %s92, %s106
      %p108 = scmp.eq.s32.totalorder %s24, 0
      %p109 = por %p107, %p108
      %s110 = ssub.s32 %s18, %s25
      %p111 = scmp.eq.s32.totalorder %s110, 0
      %s113 = sadd.s32 %s112, 1
      %s114 = scalar_select %p111, %s112, %s113
      %p117 = pneg %p111
      %p118 = scmp.eq.s32.totalorder %s18, 3
      %p119 = por %p117, %p118
      %p120 = scmp.ne.s32.totalorder %s112, %s115
      %p121 = scmp.eq.s32.totalorder %s18, 0
      %p122 = por %p120, %p121
      %p123 = scmp.ne.s32.totalorder %s112, %s115
      %p124 = scmp.eq.s32.totalorder %s23, 3
      %p125 = por %p123, %p124
      %p126 = scmp.ne.s32.totalorder %s115, %s116
      %p127 = scmp.eq.s32.totalorder %s23, 0
      %p128 = por %p126, %p127
      %p129 = scmp.ne.s32.totalorder %s115, %s116
      %p130 = scmp.eq.s32.totalorder %s24, 3
      %p131 = por %p129, %p130
      %p133 = scmp.ne.s32.totalorder %s116, %s132
      %p134 = scmp.eq.s32.totalorder %s24, 0
      %p135 = por %p133, %p134
      %s136 = ssub.s32 %s18, %s25
      %p137 = scmp.eq.s32.totalorder %s136, 0
      %s139 = sadd.s32 %s138, 1
      %s140 = scalar_select %p137, %s138, %s139
      %p143 = pneg %p137
      %p144 = scmp.eq.s32.totalorder %s18, 3
      %p145 = por %p143, %p144
      %p146 = scmp.ne.s32.totalorder %s138, %s141
      %p147 = scmp.eq.s32.totalorder %s18, 0
      %p148 = por %p146, %p147
      %p149 = scmp.ne.s32.totalorder %s138, %s141
      %p150 = scmp.eq.s32.totalorder %s23, 3
      %p151 = por %p149, %p150
      %p152 = scmp.ne.s32.totalorder %s141, %s142
      %p153 = scmp.eq.s32.totalorder %s23, 0
      %p154 = por %p152, %p153
      %p155 = scmp.ne.s32.totalorder %s141, %s142
      %p156 = scmp.eq.s32.totalorder %s24, 3
      %p157 = por %p155, %p156
      %p159 = scmp.ne.s32.totalorder %s142, %s158
      %p160 = scmp.eq.s32.totalorder %s24, 0
      %p161 = por %p159, %p160
      %p162 = scmp.le.s32.totalorder 1, %s18
      %p163 = scmp.lt.s32.totalorder %s18, 5
      %p164 = pnand %p162, %p163
      %p165 = pneg %p164
      // Predicated region
      $region9: #{tpu_custom_call.1} parent=5 // pred_check
        _
      $region10: #{tpu_custom_call.1} parent=5 // pred_check_branch
        %167 = sbr.rel (%p164) target = $region12
      $region11: #{tpu_custom_call.1} parent=5 // pred_region
        %s168 = ssub.s32 %s18, 1
        // Predicated region
        $region13: #{tpu_custom_call.1} parent=11 // pred_check
          %p169 = pneg %p39
        $region14: #{tpu_custom_call.1} parent=11 // pred_check_branch
          %171 = sbr.rel (%p169) target = $region16
        $region15: #{tpu_custom_call.1} parent=11 // pred_region
          _
        $region16: #{tpu_custom_call.1} parent=11 // pred_fallthru
          _
        // Predicated region
        $region17: #{tpu_custom_call.1} parent=11 // pred_check
          %p172 = pneg %p60
        $region18: #{tpu_custom_call.1} parent=11 // pred_check_branch
          %174 = sbr.rel (%p172) target = $region20
        $region19: #{tpu_custom_call.1} parent=11 // pred_region
          _
        $region20: #{tpu_custom_call.1} parent=11 // pred_fallthru
          _
        // Predicated region
        $region21: #{tpu_custom_call.1} parent=11 // pred_check
          %p175 = pneg %p81
        $region22: #{tpu_custom_call.1} parent=11 // pred_check_branch
          %177 = sbr.rel (%p175) target = $region24
        $region23: #{tpu_custom_call.1} parent=11 // pred_region
          _
        $region24: #{tpu_custom_call.1} parent=11 // pred_fallthru
          _
        // Predicated region
        $region25: #{tpu_custom_call.1} parent=11 // pred_check
          %p178 = pneg %p102
        $region26: #{tpu_custom_call.1} parent=11 // pred_check_branch
          %180 = sbr.rel (%p178) target = $region28
        $region27: #{tpu_custom_call.1} parent=11 // pred_region
          _
        $region28: #{tpu_custom_call.1} parent=11 // pred_fallthru
          _
      $region12: #{tpu_custom_call.1} parent=5 // pred_fallthru
        _
      %p181 = scmp.lt.s32.totalorder %s18, 4
      // Predicated region
      $region29: #{tpu_custom_call.1} parent=5 // pred_check
        %p182 = pneg %p181
      $region30: #{tpu_custom_call.1} parent=5 // pred_check_branch
        %184 = sbr.rel (%p182) target = $region32
      $region31: #{tpu_custom_call.1} parent=5 // pred_region
        // Predicated region
        $region33: #{tpu_custom_call.1} parent=31 // pred_check
          %p185 = pneg %p122
        $region34: #{tpu_custom_call.1} parent=31 // pred_check_branch
          %187 = sbr.rel (%p185) target = $region36
        $region35: #{tpu_custom_call.1} parent=31 // pred_region
          %s188 = sand.u32 %s112, 1
          %s189 = scalar_lea.sflag [#allocation4], %s188
          %s190 = sand.u32 %s112, 1
          %s191 = smul.addr %s190, 256
          %s192 = scalar_lea.vmem [#allocation3], %s191
          %s193 = smul.u32 2, %s18
          %195 = vsyncadd %s189, 0
          %s196 = smul.addr %s193, 4
          %s197 = scalar_lea.hbm %s4, %s196
          %s198 = sshll.u32 %s197, 4
          %s199 = int_to_ptr.hbm [resolvable:$true] %s198
          %s200 = sshll.u32 %s192, 4
          %s201 = int_to_ptr.vmem [resolvable:$true] %s200
          %206 = dma.hbm_to_vmem [thread:$0]  %s199, 4096, %s201, %s189, 512, 128, 8
        $region36: #{tpu_custom_call.1} parent=31 // pred_fallthru
          _
      $region32: #{tpu_custom_call.1} parent=5 // pred_fallthru
        _
      %p207 = scmp.le.s32.totalorder 1, %s18
      %p208 = scmp.lt.s32.totalorder %s18, 5
      %p209 = pnand %p207, %p208
      %p210 = pneg %p209
      // Predicated region
      $region37: #{tpu_custom_call.1} parent=5 // pred_check
        _
      $region38: #{tpu_custom_call.1} parent=5 // pred_check_branch
        %212 = sbr.rel (%p209) target = $region40
      $region39: #{tpu_custom_call.1} parent=5 // pred_region
        %s213 = ssub.s32 %s18, 1
        %s214 = sand.u32 %s115, 1
        %s215 = scalar_lea.sflag [#allocation4], %s214
        %s216 = sand.u32 %s115, 1
        %s217 = smul.addr %s216, 256
        %s218 = scalar_lea.vmem [#allocation3], %s217
        // Predicated region
        $region41: #{tpu_custom_call.1} parent=39 // pred_check
          %p219 = pneg %p128
        $region42: #{tpu_custom_call.1} parent=39 // pred_check_branch
          %221 = sbr.rel (%p219) target = $region44
        $region43: #{tpu_custom_call.1} parent=39 // pred_region
          %223 = dma.done %s215, 4096
        $region44: #{tpu_custom_call.1} parent=39 // pred_fallthru
          _
        %p224 = pneg %p39
        %p225 = pneg %p36
        %p226 = pneg %p60
        %p227 = pneg %p57
        %p228 = pneg %p81
        %p229 = pneg %p78
        %p230 = pneg %p102
        %p231 = pneg %p99
        %s232 = sand.u32 %s115, 1
        %s233 = scalar_lea.sflag [#allocation4], %s232
        %s234 = sand.u32 %s115, 1
        %s235 = smul.addr %s234, 256
        %s236 = scalar_lea.vmem [#allocation3], %s235
        %p237 = pneg %p128
        %p238 = pneg %p125
        %p239 = pneg %p154
        %p240 = pneg %p151
        %s241 = sand.u32 %s141, 1
        %s242 = scalar_lea.sflag [#allocation5], %s241
        %s243 = sand.u32 %s141, 1
        %s244 = smul.addr %s243, 16
        %s245 = scalar_lea.vmem [#allocation6], %s244
        %s246 = smul.u32 2, %s23
        %s247 = smul.u32 2, %s23
        %v249 = vld [vmem:[%s2] sm:$0xff]
        %v250 = vld [vmem:[%s218] sm:$0xff]
        %v251 = vld [vmem:[%s218 + $0x8] sm:$0xff]
        %v252 = vld [vmem:[%s218 + $0x10] sm:$0xff]
        %v253 = vld [vmem:[%s218 + $0x18] sm:$0xff]
        %v254 = vld [vmem:[%s218 + $0x20] sm:$0xff]
        %v255 = vld [vmem:[%s218 + $0x28] sm:$0xff]
        %v256 = vld [vmem:[%s218 + $0x30] sm:$0xff]
        %v257 = vld [vmem:[%s218 + $0x38] sm:$0xff]
        %v258 = vld [vmem:[%s218 + $0x40] sm:$0xff]
        %v259 = vld [vmem:[%s218 + $0x48] sm:$0xff]
        %v260 = vld [vmem:[%s218 + $0x50] sm:$0xff]
        %v261 = vld [vmem:[%s218 + $0x58] sm:$0xff]
        %v262 = vld [vmem:[%s218 + $0x60] sm:$0xff]
        %v263 = vld [vmem:[%s218 + $0x68] sm:$0xff]
        %v264 = vld [vmem:[%s218 + $0x70] sm:$0xff]
        %v265 = vld [vmem:[%s218 + $0x78] sm:$0xff]
        %v266 = vld [vmem:[%s218 + $0x80] sm:$0xff]
        %v267 = vld [vmem:[%s218 + $0x88] sm:$0xff]
        %v268 = vld [vmem:[%s218 + $0x90] sm:$0xff]
        %v269 = vld [vmem:[%s218 + $0x98] sm:$0xff]
        %v270 = vld [vmem:[%s218 + $0xa0] sm:$0xff]
        %v271 = vld [vmem:[%s218 + $0xa8] sm:$0xff]
        %v272 = vld [vmem:[%s218 + $0xb0] sm:$0xff]
        %v273 = vld [vmem:[%s218 + $0xb8] sm:$0xff]
        %v274 = vld [vmem:[%s218 + $0xc0] sm:$0xff]
        %v275 = vld [vmem:[%s218 + $0xc8] sm:$0xff]
        %v276 = vld [vmem:[%s218 + $0xd0] sm:$0xff]
        %v277 = vld [vmem:[%s218 + $0xd8] sm:$0xff]
        %v278 = vld [vmem:[%s218 + $0xe0] sm:$0xff]
        %v279 = vld [vmem:[%s218 + $0xe8] sm:$0xff]
        %v280 = vld [vmem:[%s218 + $0xf0] sm:$0xff]
        %v281 = vld [vmem:[%s218 + $0xf8] sm:$0xff]
        %v282 = vunpack.c.l.bf16 %v250
        %v283 = vunpack.c.h.bf16 %v250
        %v284 = vunpack.c.l.bf16 %v251
        %v285 = vunpack.c.h.bf16 %v251
        %v286 = vunpack.c.l.bf16 %v252
        %v287 = vunpack.c.h.bf16 %v252
        %v288 = vunpack.c.l.bf16 %v253
        %v289 = vunpack.c.h.bf16 %v253
        %v290 = vunpack.c.l.bf16 %v254
        %v291 = vunpack.c.h.bf16 %v254
        %v292 = vunpack.c.l.bf16 %v255
        %v293 = vunpack.c.h.bf16 %v255
        %v294 = vunpack.c.l.bf16 %v256
        %v295 = vunpack.c.h.bf16 %v256
        %v296 = vunpack.c.l.bf16 %v257
        %v297 = vunpack.c.h.bf16 %v257
        %v298 = vunpack.c.l.bf16 %v258
        %v299 = vunpack.c.h.bf16 %v258
        %v300 = vunpack.c.l.bf16 %v259
        %v301 = vunpack.c.h.bf16 %v259
        %v302 = vunpack.c.l.bf16 %v260
        %v303 = vunpack.c.h.bf16 %v260
        %v304 = vunpack.c.l.bf16 %v261
        %v305 = vunpack.c.h.bf16 %v261
        %v306 = vunpack.c.l.bf16 %v262
        %v307 = vunpack.c.h.bf16 %v262
        %v308 = vunpack.c.l.bf16 %v263
        %v309 = vunpack.c.h.bf16 %v263
        %v310 = vunpack.c.l.bf16 %v264
        %v311 = vunpack.c.h.bf16 %v264
        %v312 = vunpack.c.l.bf16 %v265
        %v313 = vunpack.c.h.bf16 %v265
        %v314 = vunpack.c.l.bf16 %v266
        %v315 = vunpack.c.h.bf16 %v266
        %v316 = vunpack.c.l.bf16 %v267
        %v317 = vunpack.c.h.bf16 %v267
        %v318 = vunpack.c.l.bf16 %v268
        %v319 = vunpack.c.h.bf16 %v268
        %v320 = vunpack.c.l.bf16 %v269
        %v321 = vunpack.c.h.bf16 %v269
        %v322 = vunpack.c.l.bf16 %v270
        %v323 = vunpack.c.h.bf16 %v270
        %v324 = vunpack.c.l.bf16 %v271
        %v325 = vunpack.c.h.bf16 %v271
        %v326 = vunpack.c.l.bf16 %v272
        %v327 = vunpack.c.h.bf16 %v272
        %v328 = vunpack.c.l.bf16 %v273
        %v329 = vunpack.c.h.bf16 %v273
        %v330 = vunpack.c.l.bf16 %v274
        %v331 = vunpack.c.h.bf16 %v274
        %v332 = vunpack.c.l.bf16 %v275
        %v333 = vunpack.c.h.bf16 %v275
        %v334 = vunpack.c.l.bf16 %v276
        %v335 = vunpack.c.h.bf16 %v276
        %v336 = vunpack.c.l.bf16 %v277
        %v337 = vunpack.c.h.bf16 %v277
        %v338 = vunpack.c.l.bf16 %v278
        %v339 = vunpack.c.h.bf16 %v278
        %v340 = vunpack.c.l.bf16 %v279
        %v341 = vunpack.c.h.bf16 %v279
        %v342 = vunpack.c.l.bf16 %v280
        %v343 = vunpack.c.h.bf16 %v280
        %v344 = vunpack.c.l.bf16 %v281
        %v345 = vunpack.c.h.bf16 %v281
        %v346 = vmul.f32 %v282, %v282
        %v347 = vmul.f32 %v283, %v283
        %v348 = vmul.f32 %v284, %v284
        %v349 = vmul.f32 %v285, %v285
        %v350 = vmul.f32 %v286, %v286
        %v351 = vmul.f32 %v287, %v287
        %v352 = vmul.f32 %v288, %v288
        %v353 = vmul.f32 %v289, %v289
        %v354 = vmul.f32 %v290, %v290
        %v355 = vmul.f32 %v291, %v291
        %v356 = vmul.f32 %v292, %v292
        %v357 = vmul.f32 %v293, %v293
        %v358 = vmul.f32 %v294, %v294
        %v359 = vmul.f32 %v295, %v295
        %v360 = vmul.f32 %v296, %v296
        %v361 = vmul.f32 %v297, %v297
        %v362 = vmul.f32 %v298, %v298
        %v363 = vmul.f32 %v299, %v299
        %v364 = vmul.f32 %v300, %v300
        %v365 = vmul.f32 %v301, %v301
        %v366 = vmul.f32 %v302, %v302
        %v367 = vmul.f32 %v303, %v303
        %v368 = vmul.f32 %v304, %v304
        %v369 = vmul.f32 %v305, %v305
        %v370 = vmul.f32 %v306, %v306
        %v371 = vmul.f32 %v307, %v307
        %v372 = vmul.f32 %v308, %v308
        %v373 = vmul.f32 %v309, %v309
        %v374 = vmul.f32 %v310, %v310
        %v375 = vmul.f32 %v311, %v311
        %v376 = vmul.f32 %v312, %v312
        %v377 = vmul.f32 %v313, %v313
        %v378 = vmul.f32 %v314, %v314
        %v379 = vmul.f32 %v315, %v315
        %v380 = vmul.f32 %v316, %v316
        %v381 = vmul.f32 %v317, %v317
        %v382 = vmul.f32 %v318, %v318
        %v383 = vmul.f32 %v319, %v319
        %v384 = vmul.f32 %v320, %v320
        %v385 = vmul.f32 %v321, %v321
        %v386 = vmul.f32 %v322, %v322
        %v387 = vmul.f32 %v323, %v323
        %v388 = vmul.f32 %v324, %v324
        %v389 = vmul.f32 %v325, %v325
        %v390 = vmul.f32 %v326, %v326
        %v391 = vmul.f32 %v327, %v327
        %v392 = vmul.f32 %v328, %v328
        %v393 = vmul.f32 %v329, %v329
        %v394 = vmul.f32 %v330, %v330
        %v395 = vmul.f32 %v331, %v331
        %v396 = vmul.f32 %v332, %v332
        %v397 = vmul.f32 %v333, %v333
        %v398 = vmul.f32 %v334, %v334
        %v399 = vmul.f32 %v335, %v335
        %v400 = vmul.f32 %v336, %v336
        %v401 = vmul.f32 %v337, %v337
        %v402 = vmul.f32 %v338, %v338
        %v403 = vmul.f32 %v339, %v339
        %v404 = vmul.f32 %v340, %v340
        %v405 = vmul.f32 %v341, %v341
        %v406 = vmul.f32 %v342, %v342
        %v407 = vmul.f32 %v343, %v343
        %v408 = vmul.f32 %v344, %v344
        %v409 = vmul.f32 %v345, %v345
        %v410 = vpack.c.bf16 %v348, %v346
        %v411 = vpack.c.bf16 %v349, %v347
        %v412 = vpack.c.bf16 %v352, %v350
        %v413 = vpack.c.bf16 %v353, %v351
        %v414 = vpack.c.bf16 %v356, %v354
        %v415 = vpack.c.bf16 %v357, %v355
        %v416 = vpack.c.bf16 %v360, %v358
        %v417 = vpack.c.bf16 %v361, %v359
        %v418 = vpack.c.bf16 %v364, %v362
        %v419 = vpack.c.bf16 %v365, %v363
        %v420 = vpack.c.bf16 %v368, %v366
        %v421 = vpack.c.bf16 %v369, %v367
        %v422 = vpack.c.bf16 %v372, %v370
        %v423 = vpack.c.bf16 %v373, %v371
        %v424 = vpack.c.bf16 %v376, %v374
        %v425 = vpack.c.bf16 %v377, %v375
        %v426 = vpack.c.bf16 %v380, %v378
        %v427 = vpack.c.bf16 %v381, %v379
        %v428 = vpack.c.bf16 %v384, %v382
        %v429 = vpack.c.bf16 %v385, %v383
        %v430 = vpack.c.bf16 %v388, %v386
        %v431 = vpack.c.bf16 %v389, %v387
        %v432 = vpack.c.bf16 %v392, %v390
        %v433 = vpack.c.bf16 %v393, %v391
        %v434 = vpack.c.bf16 %v396, %v394
        %v435 = vpack.c.bf16 %v397, %v395
        %v436 = vpack.c.bf16 %v400, %v398
        %v437 = vpack.c.bf16 %v401, %v399
        %v438 = vpack.c.bf16 %v404, %v402
        %v439 = vpack.c.bf16 %v405, %v403
        %v440 = vpack.c.bf16 %v408, %v406
        %v441 = vpack.c.bf16 %v409, %v407
        %442 = vmatpush.bf16.msra.mxu0 %v424
        %443 = vmatpush.bf16.msra.mxu0 %v422
        %444 = vmatpush.bf16.msra.mxu0 %v420
        %445 = vmatpush.bf16.msra.mxu0 %v418
        %446 = vmatpush.bf16.msra.mxu0 %v416
        %447 = vmatpush.bf16.msra.mxu0 %v414
        %448 = vmatpush.bf16.msra.mxu0 %v412
        %449 = vmatpush.bf16.msra.mxu0 %v410
        %450 = vmatmul.bf16.gmra.mxu0 1065369472
        %v451 = vpop.f32.mrf.mxu0
        %v452 = vadd.f32 0.0, %v451
        %v453 = vpop.f32.mrf.mxu0
        %454 = vdwg.mxu0
        %455 = vmatpush.bf16.msra.mxu0 %v440
        %456 = vmatpush.bf16.msra.mxu0 %v438
        %457 = vmatpush.bf16.msra.mxu0 %v436
        %458 = vmatpush.bf16.msra.mxu0 %v434
        %459 = vmatpush.bf16.msra.mxu0 %v432
        %460 = vmatpush.bf16.msra.mxu0 %v430
        %461 = vmatpush.bf16.msra.mxu0 %v428
        %462 = vmatpush.bf16.msra.mxu0 %v426
        %463 = vmatmul.bf16.gmra.mxu0 1065369472
        %v464 = vpop.f32.mrf.mxu0
        %v465 = vadd.f32 %v452, %v464
        %v466 = vpop.f32.mrf.mxu0
        %467 = vdwg.mxu0
        %468 = vmatpush.bf16.msra.mxu0 %v425
        %469 = vmatpush.bf16.msra.mxu0 %v423
        %470 = vmatpush.bf16.msra.mxu0 %v421
        %471 = vmatpush.bf16.msra.mxu0 %v419
        %472 = vmatpush.bf16.msra.mxu0 %v417
        %473 = vmatpush.bf16.msra.mxu0 %v415
        %474 = vmatpush.bf16.msra.mxu0 %v413
        %475 = vmatpush.bf16.msra.mxu0 %v411
        %476 = vmatmul.bf16.gmra.mxu0 1065369472
        %v477 = vpop.f32.mrf.mxu0
        %v478 = vadd.f32 0.0, %v477
        %v479 = vpop.f32.mrf.mxu0
        %480 = vdwg.mxu0
        %481 = vmatpush.bf16.msra.mxu0 %v441
        %482 = vmatpush.bf16.msra.mxu0 %v439
        %483 = vmatpush.bf16.msra.mxu0 %v437
        %484 = vmatpush.bf16.msra.mxu0 %v435
        %485 = vmatpush.bf16.msra.mxu0 %v433
        %486 = vmatpush.bf16.msra.mxu0 %v431
        %487 = vmatpush.bf16.msra.mxu0 %v429
        %488 = vmatpush.bf16.msra.mxu0 %v427
        %489 = vmatmul.bf16.gmra.mxu0 1065369472
        %v490 = vpop.f32.mrf.mxu0
        %v491 = vadd.f32 %v478, %v490
        %v492 = vpop.f32.mrf.mxu0
        %493 = vdwg.mxu0
        %v494 = vmax.f32 %v465, 1e-30
        %v495 = vmax.f32 %v491, 1e-30
        %v496 = vrsqrt.pop %v494
        %v497 = vmul.f32 %v496, %v494
        %v498 = vmul.f32 %v497, %v496
        %v499 = vmul.f32 0.5, %v498
        %v500 = vsub.f32 1.5, %v499
        %v501 = vmul.f32 %v496, %v500
        %vm502 = vweird.f32 %v494
        %vm503 = vweird.f32 %v496
        %vm504 = vmor %vm502, %vm503
        %v505 = vsel %vm504, %v496, %v501
        %v506 = vrsqrt.pop %v495
        %v507 = vmul.f32 %v506, %v495
        %v508 = vmul.f32 %v507, %v506
        %v509 = vmul.f32 0.5, %v508
        %v510 = vsub.f32 1.5, %v509
        %v511 = vmul.f32 %v506, %v510
        %vm512 = vweird.f32 %v495
        %vm513 = vweird.f32 %v506
        %vm514 = vmor %vm512, %vm513
        %v515 = vsel %vm514, %v506, %v511
        %v516 = vld [vmem:[%s1] sm:$0xff]
        %s517 = sld [smem:[#allocation2]]
        %v519 = vunpack.c.l.b16 %v249
        %v520 = vunpack.c.h.b16 %v249
        %v521 = vpack.c.b16 %v519, %v519
        %v522 = vpack.c.b16 %v520, %v520
        %v557 = vunpack.c.l.b16 %v250
        %v558 = vunpack.c.h.b16 %v250
        %v559 = vunpack.c.l.b16 %v251
        %v560 = vunpack.c.h.b16 %v251
        %v561 = vunpack.c.l.b16 %v252
        %v562 = vunpack.c.h.b16 %v252
        %v563 = vunpack.c.l.b16 %v253
        %v564 = vunpack.c.h.b16 %v253
        %v565 = vunpack.c.l.b16 %v254
        %v566 = vunpack.c.h.b16 %v254
        %v567 = vunpack.c.l.b16 %v255
        %v568 = vunpack.c.h.b16 %v255
        %v569 = vunpack.c.l.b16 %v256
        %v570 = vunpack.c.h.b16 %v256
        %v571 = vunpack.c.l.b16 %v257
        %v572 = vunpack.c.h.b16 %v257
        %v573 = vunpack.c.l.b16 %v258
        %v574 = vunpack.c.h.b16 %v258
        %v575 = vunpack.c.l.b16 %v259
        %v576 = vunpack.c.h.b16 %v259
        %v577 = vunpack.c.l.b16 %v260
        %v578 = vunpack.c.h.b16 %v260
        %v579 = vunpack.c.l.b16 %v261
        %v580 = vunpack.c.h.b16 %v261
        %v581 = vunpack.c.l.b16 %v262
        %v582 = vunpack.c.h.b16 %v262
        %v583 = vunpack.c.l.b16 %v263
        %v584 = vunpack.c.h.b16 %v263
        %v585 = vunpack.c.l.b16 %v264
        %v586 = vunpack.c.h.b16 %v264
        %v587 = vunpack.c.l.b16 %v265
        %v588 = vunpack.c.h.b16 %v265
        %v589 = vunpack.c.l.b16 %v266
        %v590 = vunpack.c.h.b16 %v266
        %v591 = vunpack.c.l.b16 %v267
        %v592 = vunpack.c.h.b16 %v267
        %v593 = vunpack.c.l.b16 %v268
        %v594 = vunpack.c.h.b16 %v268
        %v595 = vunpack.c.l.b16 %v269
        %v596 = vunpack.c.h.b16 %v269
        %v597 = vunpack.c.l.b16 %v270
        %v598 = vunpack.c.h.b16 %v270
        %v599 = vunpack.c.l.b16 %v271
        %v600 = vunpack.c.h.b16 %v271
        %v601 = vunpack.c.l.b16 %v272
        %v602 = vunpack.c.h.b16 %v272
        %v603 = vunpack.c.l.b16 %v273
        %v604 = vunpack.c.h.b16 %v273
        %v605 = vunpack.c.l.b16 %v274
        %v606 = vunpack.c.h.b16 %v274
        %v607 = vunpack.c.l.b16 %v275
        %v608 = vunpack.c.h.b16 %v275
        %v609 = vunpack.c.l.b16 %v276
        %v610 = vunpack.c.h.b16 %v276
        %v611 = vunpack.c.l.b16 %v277
        %v612 = vunpack.c.h.b16 %v277
        %v613 = vunpack.c.l.b16 %v278
        %v614 = vunpack.c.h.b16 %v278
        %v615 = vunpack.c.l.b16 %v279
        %v616 = vunpack.c.h.b16 %v279
        %v617 = vunpack.c.l.b16 %v280
        %v618 = vunpack.c.h.b16 %v280
        %v619 = vunpack.c.l.b16 %v281
        %v620 = vunpack.c.h.b16 %v281
        %v621 = vpack.c.b16 %v559, %v557
        %v622 = vpack.c.b16 %v560, %v558
        %v623 = vpack.c.b16 %v563, %v561
        %v624 = vpack.c.b16 %v564, %v562
        %v625 = vpack.c.b16 %v567, %v565
        %v626 = vpack.c.b16 %v568, %v566
        %v627 = vpack.c.b16 %v571, %v569
        %v628 = vpack.c.b16 %v572, %v570
        %v629 = vpack.c.b16 %v575, %v573
        %v630 = vpack.c.b16 %v576, %v574
        %v631 = vpack.c.b16 %v579, %v577
        %v632 = vpack.c.b16 %v580, %v578
        %v633 = vpack.c.b16 %v583, %v581
        %v634 = vpack.c.b16 %v584, %v582
        %v635 = vpack.c.b16 %v587, %v585
        %v636 = vpack.c.b16 %v588, %v586
        %v637 = vpack.c.b16 %v591, %v589
        %v638 = vpack.c.b16 %v592, %v590
        %v639 = vpack.c.b16 %v595, %v593
        %v640 = vpack.c.b16 %v596, %v594
        %v641 = vpack.c.b16 %v599, %v597
        %v642 = vpack.c.b16 %v600, %v598
        %v643 = vpack.c.b16 %v603, %v601
        %v644 = vpack.c.b16 %v604, %v602
        %v645 = vpack.c.b16 %v607, %v605
        %v646 = vpack.c.b16 %v608, %v606
        %v647 = vpack.c.b16 %v611, %v609
        %v648 = vpack.c.b16 %v612, %v610
        %v649 = vpack.c.b16 %v615, %v613
        %v650 = vpack.c.b16 %v616, %v614
        %v651 = vpack.c.b16 %v619, %v617
        %v652 = vpack.c.b16 %v620, %v618
        %685 = vmatpush.bf16.msra.mxu0 %v635
        %686 = vmatpush.bf16.msra.mxu0 %v633
        %687 = vmatpush.bf16.msra.mxu0 %v631
        %688 = vmatpush.bf16.msra.mxu0 %v629
        %689 = vmatpush.bf16.msra.mxu0 %v627
        %690 = vmatpush.bf16.msra.mxu0 %v625
        %691 = vmatpush.bf16.msra.mxu0 %v623
        %692 = vmatpush.bf16.msra.mxu0 %v621
        %693 = vmatmul.bf16.gmra.mxu0 %v521
        %v694 = vpop.f32.mrf.mxu0
        %v695 = vadd.f32 0.0, %v694
        %v696 = vpop.f32.mrf.mxu0
        %697 = vdwg.mxu0
        %698 = vmatpush.bf16.msra.mxu0 %v651
        %699 = vmatpush.bf16.msra.mxu0 %v649
        %700 = vmatpush.bf16.msra.mxu0 %v647
        %701 = vmatpush.bf16.msra.mxu0 %v645
        %702 = vmatpush.bf16.msra.mxu0 %v643
        %703 = vmatpush.bf16.msra.mxu0 %v641
        %704 = vmatpush.bf16.msra.mxu0 %v639
        %705 = vmatpush.bf16.msra.mxu0 %v637
        %706 = vmatmul.bf16.gmra.mxu0 %v522
        %v707 = vpop.f32.mrf.mxu0
        %v708 = vadd.f32 %v695, %v707
        %v709 = vpop.f32.mrf.mxu0
        %710 = vdwg.mxu0
        %711 = vmatpush.bf16.msra.mxu0 %v636
        %712 = vmatpush.bf16.msra.mxu0 %v634
        %713 = vmatpush.bf16.msra.mxu0 %v632
        %714 = vmatpush.bf16.msra.mxu0 %v630
        %715 = vmatpush.bf16.msra.mxu0 %v628
        %716 = vmatpush.bf16.msra.mxu0 %v626
        %717 = vmatpush.bf16.msra.mxu0 %v624
        %718 = vmatpush.bf16.msra.mxu0 %v622
        %719 = vmatmul.bf16.gmra.mxu0 %v521
        %v720 = vpop.f32.mrf.mxu0
        %v721 = vadd.f32 0.0, %v720
        %v722 = vpop.f32.mrf.mxu0
        %723 = vdwg.mxu0
        %724 = vmatpush.bf16.msra.mxu0 %v652
        %725 = vmatpush.bf16.msra.mxu0 %v650
        %726 = vmatpush.bf16.msra.mxu0 %v648
        %727 = vmatpush.bf16.msra.mxu0 %v646
        %728 = vmatpush.bf16.msra.mxu0 %v644
        %729 = vmatpush.bf16.msra.mxu0 %v642
        %730 = vmatpush.bf16.msra.mxu0 %v640
        %731 = vmatpush.bf16.msra.mxu0 %v638
        %732 = vmatmul.bf16.gmra.mxu0 %v522
        %v733 = vpop.f32.mrf.mxu0
        %v734 = vadd.f32 %v721, %v733
        %v735 = vpop.f32.mrf.mxu0
        %736 = vdwg.mxu0
        %738 = vset.pattern.permute.xlu0 0
        %739 = vperm.xlu0 %738, %v516
        %v740 = vpop.permute.xlu0 %739
        %v742 = vmul.f32 %v708, %v740
        %v743 = vmul.f32 %v734, %v740
        %v744 = vperm.slane %v505, 0
        %v745 = vperm.slane %v515, 0
        %v746 = vmul.f32 %v742, %v744
        %v747 = vmul.f32 %v743, %v745
        %v748 = vmax.f32 %v746, -1.0
        %v749 = vmax.f32 %v747, -1.0
        %v750 = vmin.f32 %v748, 1.0
        %v751 = vmin.f32 %v749, 1.0
        %v752 = vlaneseq
        %v753 = vand.u32 %v752, 127
        %v754 = vadd.s32 %v753, 128
        %v755 = vld [vmem:[%s0] sm:$0xff]
        %s756 = smul.u32 %s23, 256
        %v757 = vstv %s756
        %v758 = vsub.s32 %v755, %v757
        %759 = vset.pattern.permute.xlu0 0
        %760 = vperm.xlu0 %759, %v758
        %v761 = vpop.permute.xlu0 %760
        %vm762 = vcmp.eq.s32.totalorder %v753, %v761
        %vm763 = vcmp.eq.s32.totalorder %v754, %v761
        %v764 = vstv %s517
        %v765 = vadd.f32 %v764, %v750
        %v766 = vadd.f32 %v764, %v751
        %v767 = vmul.f32 %v750, %v765
        %v768 = vmul.f32 %v751, %v766
        %769 = vset.pattern.permute.xlu0 1
        %770 = vperm.xlu0 %769, %v516
        %v771 = vpop.permute.xlu0 %770
        %vm773 = vcmp.gt.f32.partialorder %v750, %v771
        %vm774 = vcmp.gt.f32.partialorder %v751, %v771
        %v775 = vsel %vm773, %v767, %v750
        %v776 = vsel %vm774, %v768, %v751
        %777 = vset.pattern.permute.xlu0 2
        %778 = vperm.xlu0 %777, %v516
        %v779 = vpop.permute.xlu0 %778
        %v781 = vsel %vm762, %v779, %v775
        %v782 = vsel %vm763, %v779, %v776
        %v783 = vmul.f32 %v781, 64.0
        %v784 = vmul.f32 %v782, 64.0
        %785 = vst [vmem:[%s245] sm:$0xff] %v783
        %786 = vst [vmem:[%s245 + $0x8] sm:$0xff] %v784
        %s787 = sand.u32 %s141, 1
        %s788 = scalar_lea.sflag [#allocation5], %s787
        %s789 = sand.u32 %s141, 1
        %s790 = smul.addr %s789, 16
        %s791 = scalar_lea.vmem [#allocation6], %s790
        // Predicated region
        $region45: #{tpu_custom_call.1} parent=39 // pred_check
          %p792 = pneg %p151
        $region46: #{tpu_custom_call.1} parent=39 // pred_check_branch
          %794 = sbr.rel (%p792) target = $region48
        $region47: #{tpu_custom_call.1} parent=39 // pred_region
          %s795 = smul.u32 2, %s23
          %797 = vsyncadd %s788, 0
          %s798 = smul.addr %s795, 8
          %s799 = scalar_lea.hbm %s5, %s798
          %s801 = sshll.u32 %s791, 4
          %s802 = int_to_ptr.vmem [resolvable:$true] %s801
          %s803 = sshll.u32 %s799, 4
          %s804 = int_to_ptr.hbm [resolvable:$true] %s803
          %806 = dma.vmem_to_hbm [thread:$0]  %s802, 256, %s804, %s788
        $region48: #{tpu_custom_call.1} parent=39 // pred_fallthru
          _
      $region40: #{tpu_custom_call.1} parent=5 // pred_fallthru
        _
      %p807 = scmp.le.s32.totalorder 2, %s18
      // Predicated region
      $region49: #{tpu_custom_call.1} parent=5 // pred_check
        %p808 = pneg %p807
      $region50: #{tpu_custom_call.1} parent=5 // pred_check_branch
        %810 = sbr.rel (%p808) target = $region52
      $region51: #{tpu_custom_call.1} parent=5 // pred_region
        %s811 = ssub.s32 %s18, 2
        // Predicated region
        $region53: #{tpu_custom_call.1} parent=51 // pred_check
          %p812 = pneg %p157
        $region54: #{tpu_custom_call.1} parent=51 // pred_check_branch
          %814 = sbr.rel (%p812) target = $region56
        $region55: #{tpu_custom_call.1} parent=51 // pred_region
          %s815 = sand.u32 %s142, 1
          %s816 = scalar_lea.sflag [#allocation5], %s815
          %s817 = sand.u32 %s142, 1
          %s818 = smul.addr %s817, 16
          %s819 = scalar_lea.vmem [#allocation6], %s818
          %821 = dma.done %s816, 256
        $region56: #{tpu_custom_call.1} parent=51 // pred_fallthru
          _
      $region52: #{tpu_custom_call.1} parent=5 // pred_fallthru
        _
    $region6: #{tpu_custom_call.1} parent=1 // loop_footer
      %s22 = sadd.s32 1, %s18
    $region7: #{tpu_custom_call.1} parent=1 // loop_footer_branch
      %17 = sbr.rel target = $region3
    $region8: #{tpu_custom_call.1} parent=1 // loop_exit
      _
    %822 = vsyncpa [#allocation4], 1
    %s823 = scalar_lea.sflag [#allocation4], 1
    %824 = vsyncpa %s823, 1
    %825 = vsyncpa [#allocation5], 1
    %s826 = scalar_lea.sflag [#allocation5], 1
    %827 = vsyncpa %s826, 1

</llo_original>
